<compile_context>
chip_gen: v7x
topology: tpu7x:2x2x1
jax: 0.10.0
libtpu: 0.0.40
codegen_flags: <defaults>
</compile_context>

<pallas_src>
import functools

import jax
import jax.numpy as jnp
from jax.experimental import pallas as pl
from jax.experimental.pallas import tpu as pltpu


def _round_up(x, m):
    return ((x + m - 1) // m) * m


def _choose_block_n(n, c, itemsize, target_bytes=8 * 1024 * 1024, max_rows=8192):
    """Rows per tile: ~8 MiB per input buffer, multiple of 8, capped at 8192 rows.

    Additionally caps at ~n/4 rows (so the 'parallel' grid axis has >=4 tiles
    for v7x megacore) whenever that still leaves tiles >= ~2 MiB.
    """
    row_bytes = max(1, c * itemsize)
    rows = max(8, (target_bytes // row_bytes) // 8 * 8)
    rows = min(rows, max_rows)
    quarter = max(8, _round_up(pl.cdiv(n, 4), 8))
    if quarter * row_bytes >= 2 * 1024 * 1024:
        rows = min(rows, quarter)
    return min(rows, _round_up(n, 8))


def _lsce_kernel(logits_ref, target_ref, out_ref, *, epsilon, n_valid, c_valid):
    tn, c = logits_ref.shape
    pid = pl.program_id(0)

    x = logits_ref[...].astype(jnp.float32)                       # (TN, C)

    # Row mask for the ragged last tile.  No row padding is done in the
    # wrapper; the OOB part of a partial block is unspecified, so it must be
    # masked with a select (NaN/Inf garbage cannot leak through jnp.where).
    row = jax.lax.broadcasted_iota(jnp.int32, (tn, 1), 0)
    row_valid = (pid * tn + row) < n_valid

    # Numerically stable row-wise logsumexp over the full (unpadded) class axis.
    m = jnp.max(x, axis=-1, keepdims=True)
    lse = m + jnp.log(jnp.sum(jnp.exp(x - m), axis=-1, keepdims=True))

    # Fused weighted reduction:
    #   contrib = lse - sum_c [eps/C + (1-eps)*[c==tgt]] * x_c
    # == (eps/C)*(C*lse - sum_x) + (1-eps)*(lse - x_target).
    col = jax.lax.broadcasted_iota(jnp.int32, (tn, c), 1)
    tgt = target_ref[...]                                          # (TN, 1) int32
    w_uniform = epsilon / c_valid
    w = jnp.where(col == tgt, w_uniform + (1.0 - epsilon), w_uniform)
    contrib = lse - jnp.sum(x * w, axis=-1, keepdims=True)
    contrib = jnp.where(row_valid, contrib, 0.0)

    # One partial sum per tile, broadcast into a lane-dense block so the store
    # is an unmasked vst.
    out_ref[...] = jnp.full(out_ref.shape, jnp.sum(contrib), dtype=jnp.float32)


def label_smoothing_cross_entropy(logits, target, epsilon=0.1, *, block_n=None):
    """logits: (N, C) float (f32/bf16); target: (N,) int. Returns scalar f32."""
    n, c = logits.shape
    itemsize = jnp.dtype(logits.dtype).itemsize

    if block_n is None:
        block_n = _choose_block_n(n, c, itemsize)
    block_n = max(8, _round_up(int(block_n), 8))
    if block_n >= n:
        block_n = n          # single block covering the whole batch (full-dim rule)
    num_tiles = pl.cdiv(n, block_n)

    target_2d = target.astype(jnp.int32).reshape(n, 1)

    kernel = functools.partial(_lsce_kernel, epsilon=float(epsilon),
                               n_valid=n, c_valid=c)

    # VMEM request sized to what the tiling actually needs (2 buffers per input
    # + output + slack), capped well under the 64 MiB of a v7x TensorCore.
    tile_bytes = block_n * c * itemsize + block_n * 4
    vmem_limit = int(min(64 * 1024 * 1024, 2 * tile_bytes + 8 * 1024 * 1024))

    cost = pl.CostEstimate(
        flops=5 * n * c,
        transcendentals=n * c,
        bytes_accessed=n * c * itemsize + n * 4 + num_tiles * 8 * 128 * 4,
    )

    partials = pl.pallas_call(
        kernel,
        out_shape=jax.ShapeDtypeStruct((num_tiles, 8, 128), jnp.float32),
        grid=(num_tiles,),
        in_specs=[
            pl.BlockSpec((block_n, c), lambda i: (i, 0)),
            pl.BlockSpec((block_n, 1), lambda i: (i, 0)),
        ],
        out_specs=pl.BlockSpec((1, 8, 128), lambda i: (i, 0, 0)),
        compiler_params=pltpu.CompilerParams(
            dimension_semantics=("parallel",),
            vmem_limit_bytes=vmem_limit,
        ),
        cost_estimate=cost,
    )(logits, target_2d)

    return jnp.sum(partials[:, 0, 0]) / n


def _reference(logits, target, epsilon=0.1):
    # Pure-JAX reference mirroring the PyTorch module (reduction='mean').
    c = logits.shape[-1]
    log_preds = jax.nn.log_softmax(logits.astype(jnp.float32), axis=-1)
    loss = jnp.mean(-jnp.sum(log_preds, axis=-1))
    nll = jnp.mean(-jnp.take_along_axis(
        log_preds, target.astype(jnp.int32)[:, None], axis=-1)[:, 0])
    return epsilon * (loss / c) + (1.0 - epsilon) * nll


if __name__ == "__main__":
    key = jax.random.PRNGKey(0)
    k1, k2 = jax.random.split(key)

    # Water-meter digit recognition: 11 classes, small batch; shapes deliberately
    # not multiples of (8, 128) to exercise the ragged last tile + class-narrow path.
    N, C = 50, 11
    logits = jax.random.normal(k1, (N, C), dtype=jnp.float32) * 3.0
    target = jax.random.randint(k2, (N,), 0, C, dtype=jnp.int32)

    # Multi-tile path: 7 grid steps, "parallel" axis, ragged last tile row-masked.
    out_tiled = label_smoothing_cross_entropy(logits, target, epsilon=0.1, block_n=8)
    # Auto-tiled path: single full-extent block covering the whole batch.
    out_auto = label_smoothing_cross_entropy(logits, target, epsilon=0.1)
    out_tiled, out_auto = jax.block_until_ready((out_tiled, out_auto))

    ref = _reference(logits, target, epsilon=0.1)
    assert jnp.allclose(out_tiled, ref, atol=1e-5, rtol=1e-5), (out_tiled, ref)
    assert jnp.allclose(out_auto, ref, atol=1e-5, rtol=1e-5), (out_auto, ref)

    print("KERNEL_OK")
</pallas_src>

<mosaic_0001>
module attributes {stable_mosaic.version = 11 : i64} {
  func.func @_lsce_kernel(%arg0: i32, %arg1: memref<8x11xf32, #tpu.memory_space<vmem>>, %arg2: memref<8x1xi32, #tpu.memory_space<vmem>>, %arg3: memref<1x8x128xf32, #tpu.memory_space<vmem>>) attributes {dimension_semantics = [#tpu.dimension_semantics<parallel>], iteration_bounds = array<i64: 7>, scalar_prefetch = 0 : i64, scratch_operands = 0 : i64, tpu.core_type = #tpu.core_type<tc>, window_params = [{transform_indices = @transform_0, window_bounds = array<i64: 8, 11>}, {transform_indices = @transform_1, window_bounds = array<i64: 8, 1>}, {transform_indices = @transform_2, window_bounds = array<i64: 1, 8, 128>}]} {
    %c0 = arith.constant 0 : index
    %c0_0 = arith.constant 0 : index
    %0 = vector.load %arg1[%c0, %c0_0] : memref<8x11xf32, #tpu.memory_space<vmem>>, vector<8x11xf32>
    %1 = tpu.iota {dimensions = array<i32: 0>} : vector<8x1xi32>
    %c8_i32 = arith.constant 8 : i32
    %2 = arith.muli %arg0, %c8_i32 : i32
    %3 = vector.broadcast %2 : i32 to vector<8x1xi32>
    %4 = arith.addi %3, %1 : vector<8x1xi32>
    %c50_i32 = arith.constant 50 : i32
    %5 = vector.broadcast %c50_i32 : i32 to vector<8x1xi32>
    %6 = arith.cmpi slt, %4, %5 : vector<8x1xi32>
    %cst = arith.constant dense<0xFF800000> : vector<8xf32>
    %7 = vector.multi_reduction <maximumf>, %0, %cst [1] : vector<8x11xf32> to vector<8xf32>
    %8 = vector.shape_cast %7 : vector<8xf32> to vector<8x1xf32>
    %9 = vector.broadcast %8 : vector<8x1xf32> to vector<8x11xf32>
    %10 = arith.subf %0, %9 : vector<8x11xf32>
    %11 = math.exp %10 : vector<8x11xf32>
    %cst_1 = arith.constant dense<0.000000e+00> : vector<8xf32>
    %12 = vector.multi_reduction <add>, %11, %cst_1 [1] : vector<8x11xf32> to vector<8xf32>
    %13 = vector.shape_cast %12 : vector<8xf32> to vector<8x1xf32>
    %14 = math.log %13 : vector<8x1xf32>
    %15 = arith.addf %8, %14 : vector<8x1xf32>
    %16 = tpu.iota {dimensions = array<i32: 1>} : vector<8x11xi32>
    %c0_2 = arith.constant 0 : index
    %c0_3 = arith.constant 0 : index
    %17 = vector.load %arg2[%c0_2, %c0_3] : memref<8x1xi32, #tpu.memory_space<vmem>>, vector<8x1xi32>
    %18 = vector.broadcast %17 : vector<8x1xi32> to vector<8x11xi32>
    %19 = arith.cmpi eq, %16, %18 : vector<8x11xi32>
    %cst_4 = arith.constant 0.909090936 : f32
    %cst_5 = arith.constant 0.0090909088 : f32
    %20 = vector.broadcast %cst_4 : f32 to vector<8x11xf32>
    %21 = vector.broadcast %cst_5 : f32 to vector<8x11xf32>
    %22 = arith.select %19, %20, %21 : vector<8x11xi1>, vector<8x11xf32>
    %23 = arith.mulf %0, %22 : vector<8x11xf32>
    %cst_6 = arith.constant dense<0.000000e+00> : vector<8xf32>
    %24 = vector.multi_reduction <add>, %23, %cst_6 [1] : vector<8x11xf32> to vector<8xf32>
    %25 = vector.shape_cast %24 : vector<8xf32> to vector<8x1xf32>
    %26 = arith.subf %15, %25 : vector<8x1xf32>
    %cst_7 = arith.constant 0.000000e+00 : f32
    %27 = vector.broadcast %cst_7 : f32 to vector<8x1xf32>
    %28 = arith.select %6, %26, %27 : vector<8x1xi1>, vector<8x1xf32>
    %29 = vector.shape_cast %28 : vector<8x1xf32> to vector<1x8x1xf32>
    %cst_8 = arith.constant dense<0.000000e+00> : vector<1xf32>
    %30 = vector.multi_reduction <add>, %29, %cst_8 [1, 2] : vector<1x8x1xf32> to vector<1xf32>
    %31 = vector.shape_cast %30 : vector<1xf32> to vector<1x1x1xf32>
    %32 = vector.extract %31[0, 0, 0] : f32 from vector<1x1x1xf32>
    %33 = vector.broadcast %32 : f32 to vector<1x8x128xf32>
    %c0_9 = arith.constant 0 : index
    %c0_10 = arith.constant 0 : index
    %c0_11 = arith.constant 0 : index
    %34 = vector.load %arg3[%c0_9, %c0_10, %c0_11] : memref<1x8x128xf32, #tpu.memory_space<vmem>>, vector<1x8x128xf32>
    tpu.vector_store %arg3[%c0_9, %c0_10, %c0_11], %33 {strides = array<i32>} : memref<1x8x128xf32, #tpu.memory_space<vmem>>, vector<1x8x128xf32>,
    return
  }
  func.func @transform_0(%arg0: i32) -> (i32, i32) {
    %c0_i32 = arith.constant 0 : i32
    %c0_i32_0 = arith.constant 0 : i32
    return %arg0, %c0_i32 : i32, i32
  }
  func.func @transform_1(%arg0: i32) -> (i32, i32) {
    %c0_i32 = arith.constant 0 : i32
    %c0_i32_0 = arith.constant 0 : i32
    return %arg0, %c0_i32 : i32, i32
  }
  func.func @transform_2(%arg0: i32) -> (i32, i32, i32) {
    %c0_i32 = arith.constant 0 : i32
    %c0_i32_0 = arith.constant 0 : i32
    %c0_i32_1 = arith.constant 0 : i32
    return %arg0, %c0_i32, %c0_i32_0 : i32, i32, i32
  }
}

</mosaic_0001>

<llo_original>
// kernel: tpu_custom_call.1
$region0: #{tpu_custom_call.1}
  #allocation0 [shape = 'u32[]', space=smem, size = 0x4, offset = 0x4, fixed_abs, tag = 'smem constant byte address 0x4 - core index']
  #allocation1 [shape = 'u32[144,128]{1,0:T(1,128)}', space=vmem, size = 0x12000, scoped, tag = 'internal scratch']
  %s0 = inlined_call_operand.vmem [shape: f32[50,11], index: 0, kind: input, shape index: {}]
  %s1 = inlined_call_operand.vmem [shape: s32[50,1], index: 1, kind: input, shape index: {}]
  %s2 = inlined_call_operand.hbm [shape: f32[7,8,128], index: 2, kind: output, shape index: {}]
  %s3 = sld [smem:[#allocation0]]
  $region41: #{tpu_custom_call.1} parent=0
    _
  %s5 = ssub.s32 1, %s3
  %s6 = scalar_select 0, %s5, %s3
  $region1: #{tpu_custom_call.1} parent=0
    #allocation2 [shape = 'u8[8192]{0}', space=vmem, size = 0x2000, scoped, tag = 'output window, operand 0']
    #allocation3 [shape = 's32[2]{0}', space=sflag, size = 0x8, scoped, tag = 'scoped memory for tpu_custom_call.1']
    %7 = vsyncpa [#allocation3], 0
    %s8 = scalar_lea.sflag [#allocation3], 1
    %9 = vsyncpa %s8, 0
    loop: start=0, step=1, limit=9
    $region2: #{tpu_custom_call.1} parent=1 // loop_pre_header
      _
    $region3: #{tpu_custom_call.1} parent=1 // loop_header
      %s11 = sphi 0, %s15
      %p12 = scmp.ge.s32.totalorder %s11, 9
      %s21 = sphi 0, %s23
      %s24 = sphi 0, %s21
      %s25 = sphi 0, %s24
      %s41 = sphi 0, %s25
      %s47 = sphi 0, %s49
      %s50 = sphi 0, %s47
      %s51 = sphi 0, %s50
      %s67 = sphi 0, %s51
      %s73 = sphi 0, %s75
      %s76 = sphi 0, %s73
      %s77 = sphi 0, %s76
      %s93 = sphi 0, %s77
    $region4: #{tpu_custom_call.1} parent=1 // loop_header_branch
      %14 = sbr.rel (%p12) target = $region8
    $region5: #{tpu_custom_call.1} parent=1 // loop_body
      %s16 = ssub.s32 %s11, 1
      %s17 = ssub.s32 %s11, 2
      %s18 = sadd.s32 %s11, 1
      %s19 = ssub.s32 %s11, %s18
      %p20 = scmp.eq.s32.totalorder %s19, 0
      %s22 = sadd.s32 %s21, 1
      %s23 = scalar_select %p20, %s21, %s22
      %p26 = pneg %p20
      %p27 = scmp.eq.s32.totalorder %s11, 6
      %p28 = por %p26, %p27
      %p29 = scmp.ne.s32.totalorder %s21, %s24
      %p30 = scmp.eq.s32.totalorder %s11, 0
      %p31 = por %p29, %p30
      %p32 = scmp.ne.s32.totalorder %s21, %s24
      %p33 = scmp.eq.s32.totalorder %s16, 6
      %p34 = por %p32, %p33
      %p35 = scmp.ne.s32.totalorder %s24, %s25
      %p36 = scmp.eq.s32.totalorder %s16, 0
      %p37 = por %p35, %p36
      %p38 = scmp.ne.s32.totalorder %s24, %s25
      %p39 = scmp.eq.s32.totalorder %s17, 6
      %p40 = por %p38, %p39
      %p42 = scmp.ne.s32.totalorder %s25, %s41
      %p43 = scmp.eq.s32.totalorder %s17, 0
      %p44 = por %p42, %p43
      %s45 = ssub.s32 %s11, %s18
      %p46 = scmp.eq.s32.totalorder %s45, 0
      %s48 = sadd.s32 %s47, 1
      %s49 = scalar_select %p46, %s47, %s48
      %p52 = pneg %p46
      %p53 = scmp.eq.s32.totalorder %s11, 6
      %p54 = por %p52, %p53
      %p55 = scmp.ne.s32.totalorder %s47, %s50
      %p56 = scmp.eq.s32.totalorder %s11, 0
      %p57 = por %p55, %p56
      %p58 = scmp.ne.s32.totalorder %s47, %s50
      %p59 = scmp.eq.s32.totalorder %s16, 6
      %p60 = por %p58, %p59
      %p61 = scmp.ne.s32.totalorder %s50, %s51
      %p62 = scmp.eq.s32.totalorder %s16, 0
      %p63 = por %p61, %p62
      %p64 = scmp.ne.s32.totalorder %s50, %s51
      %p65 = scmp.eq.s32.totalorder %s17, 6
      %p66 = por %p64, %p65
      %p68 = scmp.ne.s32.totalorder %s51, %s67
      %p69 = scmp.eq.s32.totalorder %s17, 0
      %p70 = por %p68, %p69
      %s71 = ssub.s32 %s11, %s18
      %p72 = scmp.eq.s32.totalorder %s71, 0
      %s74 = sadd.s32 %s73, 1
      %s75 = scalar_select %p72, %s73, %s74
      %p78 = pneg %p72
      %p79 = scmp.eq.s32.totalorder %s11, 6
      %p80 = por %p78, %p79
      %p81 = scmp.ne.s32.totalorder %s73, %s76
      %p82 = scmp.eq.s32.totalorder %s11, 0
      %p83 = por %p81, %p82
      %p84 = scmp.ne.s32.totalorder %s73, %s76
      %p85 = scmp.eq.s32.totalorder %s16, 6
      %p86 = por %p84, %p85
      %p87 = scmp.ne.s32.totalorder %s76, %s77
      %p88 = scmp.eq.s32.totalorder %s16, 0
      %p89 = por %p87, %p88
      %p90 = scmp.ne.s32.totalorder %s76, %s77
      %p91 = scmp.eq.s32.totalorder %s17, 6
      %p92 = por %p90, %p91
      %p94 = scmp.ne.s32.totalorder %s77, %s93
      %p95 = scmp.eq.s32.totalorder %s17, 0
      %p96 = por %p94, %p95
      %p97 = scmp.le.s32.totalorder 1, %s11
      %p98 = scmp.lt.s32.totalorder %s11, 8
      %p99 = pnand %p97, %p98
      %p100 = pneg %p99
      // Predicated region
      $region9: #{tpu_custom_call.1} parent=5 // pred_check
        _
      $region10: #{tpu_custom_call.1} parent=5 // pred_check_branch
        %102 = sbr.rel (%p99) target = $region12
      $region11: #{tpu_custom_call.1} parent=5 // pred_region
        %s103 = ssub.s32 %s11, 1
      $region12: #{tpu_custom_call.1} parent=5 // pred_fallthru
        _
      %p104 = scmp.lt.s32.totalorder %s11, 7
      // Predicated region
      $region13: #{tpu_custom_call.1} parent=5 // pred_check
        %p105 = pneg %p104
      $region14: #{tpu_custom_call.1} parent=5 // pred_check_branch
        %107 = sbr.rel (%p105) target = $region16
      $region15: #{tpu_custom_call.1} parent=5 // pred_region
        // Predicated region
        $region17: #{tpu_custom_call.1} parent=15 // pred_check
          %p108 = pneg %p31
        $region18: #{tpu_custom_call.1} parent=15 // pred_check_branch
          %110 = sbr.rel (%p108) target = $region20
        $region19: #{tpu_custom_call.1} parent=15 // pred_region
          %p111 = scmp.lt.s32.totalorder %s11, 6
          %s112 = scalar_select %p111, %s11, 6
          %s113 = smul.addr %s112, 8
          %s114 = scalar_lea.vmem %s0, %s113
        $region20: #{tpu_custom_call.1} parent=15 // pred_fallthru
          _
        // Predicated region
        $region21: #{tpu_custom_call.1} parent=15 // pred_check
          %p115 = pneg %p57
        $region22: #{tpu_custom_call.1} parent=15 // pred_check_branch
          %117 = sbr.rel (%p115) target = $region24
        $region23: #{tpu_custom_call.1} parent=15 // pred_region
          %p118 = scmp.lt.s32.totalorder %s11, 6
          %s119 = scalar_select %p118, %s11, 6
          %s120 = smul.addr %s119, 8
          %s121 = scalar_lea.vmem %s1, %s120
        $region24: #{tpu_custom_call.1} parent=15 // pred_fallthru
          _
      $region16: #{tpu_custom_call.1} parent=5 // pred_fallthru
        _
      %p122 = scmp.le.s32.totalorder 1, %s11
      %p123 = scmp.lt.s32.totalorder %s11, 8
      %p124 = pnand %p122, %p123
      %p125 = pneg %p124
      // Predicated region
      $region25: #{tpu_custom_call.1} parent=5 // pred_check
        _
      $region26: #{tpu_custom_call.1} parent=5 // pred_check_branch
        %127 = sbr.rel (%p124) target = $region28
      $region27: #{tpu_custom_call.1} parent=5 // pred_region
        %s128 = ssub.s32 %s11, 1
        %p129 = scmp.lt.s32.totalorder %s16, 6
        %s130 = scalar_select %p129, %s16, 6
        %s131 = smul.addr %s130, 8
        %s132 = scalar_lea.vmem %s0, %s131
        %p133 = pneg %p37
        %p134 = pneg %p34
        %p135 = scmp.lt.s32.totalorder %s16, 6
        %s136 = scalar_select %p135, %s16, 6
        %s137 = smul.addr %s136, 8
        %s138 = scalar_lea.vmem %s1, %s137
        %p139 = pneg %p63
        %p140 = pneg %p60
        %p141 = pneg %p89
        %p142 = pneg %p86
        %s143 = sand.u32 %s76, 1
        %s144 = scalar_lea.sflag [#allocation3], %s143
        %s145 = sand.u32 %s76, 1
        %s146 = smul.addr %s145, 8
        %s147 = scalar_lea.vmem [#allocation2], %s146
        %p148 = scmp.lt.s32.totalorder %s16, 6
        %s149 = scalar_select %p148, %s16, 6
        %s150 = smul.addr %s149, 8
        %s151 = scalar_lea.vmem %s0, %s150
        %p152 = scmp.lt.s32.totalorder %s16, 6
        %s153 = scalar_select %p152, %s16, 6
        %s154 = smul.addr %s153, 8
        %s155 = scalar_lea.vmem %s1, %s154
        %v156 = vld [vmem:[%s151] sm:$0xff]
        %v157 = vlaneseq
        %v158 = vshrl.u32 %v157, 7
        %s159 = smul.u32 %s16, 8
        %v160 = vstv %s159
        %v161 = vadd.s32 %v160, %v158
        %vm162 = vcmp.lt.s32.totalorder %v161, 50
        %vm163 = vcmask 89088
        %v164 = vsel %vm163, %v156, -inf
        %165 = vmax.xlane.f32.xlu0 %v164
        %v166 = vpop.xlane.xlu0 %165
        %v167 = vsub.f32 %v156, %v166
        %v168 = vmul.f32 %v167, 1.442695
        %v169 = vpow.pop %v168
        %v170 = vsel %vm163, %v169, 0.0
        %171 = vadd.xlane.f32.xlu0 %v170
        %v172 = vpop.xlane.xlu0 %171
        %v173 = vlog2.pop %v172
        %v174 = vmul.f32 %v173, 0.6931472
        %v175 = vadd.f32 %v166, %v174
        %v176 = vlaneseq
        %v177 = vand.u32 %v176, 127
        %v178 = vld [vmem:[%s155] sm:$0xff]
        %179 = vset.pattern.permute.xlu0 0
        %180 = vperm.xlu0 %179, %v178
        %v181 = vpop.permute.xlu0 %180
        %vm182 = vcmp.eq.s32.totalorder %v177, %v181
        %v183 = vsel %vm182, 0.90909094, 0.009090909
        %v184 = vmul.f32 %v156, %v183
        %v185 = vsel %vm163, %v184, 0.0
        %186 = vadd.xlane.f32.xlu0 %v185
        %v187 = vpop.xlane.xlu0 %186
        %v188 = vsub.f32 %v175, %v187
        %v189 = vsel %vm162, %v188, 0.0
        %vm190 = vcmask 7168
        %v191 = vsel %vm190, %v189, 0.0
        %192 = vadd.xlane.f32.xlu0 %v191
        %v193 = vpop.xlane.xlu0 %192
        %v194 = vrot.slane %v193, 4
        %v195 = vadd.f32 %v193, %v194
        %v196 = vrot.slane %v195, 2
        %v197 = vadd.f32 %v195, %v196
        %v198 = vrot.slane %v197, 1
        %v199 = vadd.f32 %v197, %v198
        %s200 = vtos %v199
        %v201 = vstv %s200
        %202 = vst [vmem:[%s147] sm:$0xff] %v201
        %s203 = sand.u32 %s76, 1
        %s204 = scalar_lea.sflag [#allocation3], %s203
        %s205 = sand.u32 %s76, 1
        %s206 = smul.addr %s205, 8
        %s207 = scalar_lea.vmem [#allocation2], %s206
        // Predicated region
        $region29: #{tpu_custom_call.1} parent=27 // pred_check
          %p208 = pneg %p86
        $region30: #{tpu_custom_call.1} parent=27 // pred_check_branch
          %210 = sbr.rel (%p208) target = $region32
        $region31: #{tpu_custom_call.1} parent=27 // pred_region
          %s212 = ssub.s32 128, 128
          %213 = vsyncadd %s204, %s212
          %s214 = smul.addr %s16, 128
          %s215 = scalar_lea.hbm %s2, %s214
          %s217 = sshll.u32 %s207, 4
          %s218 = int_to_ptr.vmem [resolvable:$true] %s217
          %220 = dma.vmem_to_hbm [thread:$0]  %s218, 128, %s215, %s204
        $region32: #{tpu_custom_call.1} parent=27 // pred_fallthru
          _
      $region28: #{tpu_custom_call.1} parent=5 // pred_fallthru
        _
      %p221 = scmp.le.s32.totalorder 2, %s11
      // Predicated region
      $region33: #{tpu_custom_call.1} parent=5 // pred_check
        %p222 = pneg %p221
      $region34: #{tpu_custom_call.1} parent=5 // pred_check_branch
        %224 = sbr.rel (%p222) target = $region36
      $region35: #{tpu_custom_call.1} parent=5 // pred_region
        %s225 = ssub.s32 %s11, 2
        // Predicated region
        $region37: #{tpu_custom_call.1} parent=35 // pred_check
          %p226 = pneg %p92
        $region38: #{tpu_custom_call.1} parent=35 // pred_check_branch
          %228 = sbr.rel (%p226) target = $region40
        $region39: #{tpu_custom_call.1} parent=35 // pred_region
          %s229 = sand.u32 %s77, 1
          %s230 = scalar_lea.sflag [#allocation3], %s229
          %s231 = sand.u32 %s77, 1
          %s232 = smul.addr %s231, 8
          %s233 = scalar_lea.vmem [#allocation2], %s232
          %234 = dma.done %s230, 128
        $region40: #{tpu_custom_call.1} parent=35 // pred_fallthru
          _
      $region36: #{tpu_custom_call.1} parent=5 // pred_fallthru
        _
    $region6: #{tpu_custom_call.1} parent=1 // loop_footer
      %s15 = sadd.s32 1, %s11
    $region7: #{tpu_custom_call.1} parent=1 // loop_footer_branch
      %10 = sbr.rel target = $region3
    $region8: #{tpu_custom_call.1} parent=1 // loop_exit
      _
    %235 = vsyncpa [#allocation3], 1
    %s236 = scalar_lea.sflag [#allocation3], 1
    %237 = vsyncpa %s236, 1

</llo_original>
